<compile_context>
chip_gen: v7x
topology: tpu7x:2x2x1
jax: 0.10.0
libtpu: 0.0.40
codegen_flags: <defaults>
</compile_context>

<pallas_src>
import functools

import jax
import jax.numpy as jnp
from jax.experimental import pallas as pl
from jax.experimental.pallas import tpu as pltpu


def _round_up(n, m):
    return ((n + m - 1) // m) * m


def _center_loss_kernel(labels_ref, x_ref, centers_ref, partial_ref, cbuf,
                        *, batch, num_classes):
    t = pl.program_id(0)
    tile_rows, feat_dim = x_ref.shape
    base = t * tile_rows

    # In-VMEM row gather: centers_ref is the whole (C, D) table resident in
    # VMEM, labels live in SMEM (scalar prefetch).  Build the gathered slab
    # with dynamic-row loads/stores; unrolled so label load + clamp + row copy
    # schedule back-to-back.
    def gather(r, carry):
        lbl = labels_ref[base + r]
        lbl = jnp.minimum(jnp.maximum(lbl, 0), num_classes - 1)  # clamp vs OOB
        cbuf[r, :] = centers_ref[lbl, :]
        return carry

    jax.lax.fori_loop(0, tile_rows, gather, 0, unroll=min(tile_rows, 8))

    x = x_ref[...].astype(jnp.float32)
    c = cbuf[...].astype(jnp.float32)

    # Mask batch-padding rows so they contribute nothing.
    row_ids = jax.lax.broadcasted_iota(jnp.int32, (tile_rows, 1), 0) + base
    valid = (row_ids < batch).astype(jnp.float32)

    diff = (x - c) * valid
    sq = diff * diff                                       # (TB, D)

    # Lane-parallel partial: fold sublane groups of 8 with VPU adds only;
    # the cross-lane reduce happens once, outside the kernel.
    folded = sq.reshape(tile_rows // 8, 8, feat_dim)
    partial_ref[...] = jnp.sum(folded, axis=0)             # (8, D)


def _pick_tile_rows(batch, feat_dim, max_tile_rows, bytes_per_elem):
    tile = min(_round_up(batch, 8), _round_up(max_tile_rows, 8))
    # Keep x double-buffer + gather slab comfortably inside v7x's smaller VMEM.
    budget = 12 << 20
    while tile > 8 and 3 * tile * feat_dim * bytes_per_elem > budget:
        tile = _round_up(tile // 2, 8)
    return tile


def center_loss(x, labels, centers, *, max_tile_rows=256):
    """x: (B, D), labels: (B,) int, centers: (C, D) -> scalar f32 loss."""
    B, D = x.shape
    C, _ = centers.shape

    if C * D * centers.dtype.itemsize > (16 << 20):
        # TODO(synk): add a double-buffered HBM row-gather path for centers
        # tables too large to keep VMEM-resident.
        raise NotImplementedError("centers table too large for VMEM-resident gather")

    labels = labels.astype(jnp.int32)

    tile_rows = _pick_tile_rows(B, D, max_tile_rows, max(x.dtype.itemsize, 4))
    b_pad = _round_up(B, tile_rows)
    if b_pad != B:
        x = jnp.pad(x, ((0, b_pad - B), (0, 0)))
        labels = jnp.pad(labels, (0, b_pad - B))
    num_tiles = b_pad // tile_rows

    kernel = functools.partial(_center_loss_kernel, batch=B, num_classes=C)

    # Explicit VMEM budget: x double buffer + resident centers + gather slab
    # + output double buffer, with slack; never below the 32 MiB default.
    vmem_need = (2 * tile_rows * D * x.dtype.itemsize
                 + C * D * centers.dtype.itemsize
                 + tile_rows * D * centers.dtype.itemsize
                 + 2 * 8 * D * 4)
    vmem_limit = int(min(max(2 * vmem_need + (1 << 20), 32 << 20), 96 << 20))

    partials = pl.pallas_call(
        kernel,
        out_shape=jax.ShapeDtypeStruct((num_tiles * 8, D), jnp.float32),
        grid_spec=pltpu.PrefetchScalarGridSpec(
            num_scalar_prefetch=1,                 # labels -> SMEM
            grid=(num_tiles,),
            in_specs=[
                # x tile, auto-pipelined across the batch.
                pl.BlockSpec((tile_rows, D), lambda t, labels: (t, 0)),
                # whole centers table, VMEM-resident (constant block index
                # -> copied in once, reused every tile).
                pl.BlockSpec((C, D), lambda t, labels: (0, 0)),
            ],
            out_specs=pl.BlockSpec((8, D), lambda t, labels: (t, 0)),
            scratch_shapes=[
                pltpu.VMEM((tile_rows, D), centers.dtype),   # gathered rows slab
            ],
        ),
        compiler_params=pltpu.CompilerParams(
            dimension_semantics=("parallel",),     # tiles independent -> shard across TCs (v7x)
            vmem_limit_bytes=vmem_limit,
        ),
    )(labels, x, centers)

    # Tiny final reduction (num_tiles*8, D) -> scalar, plus the /2.
    return 0.5 * jnp.sum(partials)


if __name__ == "__main__":
    # Small, deterministic example consistent with CenterLoss(num_classes, feat_dim).
    num_classes = 16
    feat_dim = 128
    batch = 8

    key = jax.random.PRNGKey(0)
    k_x, k_lbl, k_ctr = jax.random.split(key, 3)

    x = jax.random.normal(k_x, (batch, feat_dim), dtype=jnp.float32)
    labels = jax.random.randint(k_lbl, (batch,), 0, num_classes, dtype=jnp.int32)
    # nn.Parameter(torch.randn(num_classes, feat_dim)) -> deterministic normal init here.
    centers = jax.random.normal(k_ctr, (num_classes, feat_dim), dtype=jnp.float32)

    loss = center_loss(x, labels, centers)
    loss = jax.block_until_ready(loss)

    # Pure-JAX reference check (same semantics as the PyTorch forward).
    ref = 0.5 * jnp.sum((x - centers[labels]) ** 2)
    assert jnp.allclose(loss, ref, rtol=1e-5, atol=1e-5), (loss, ref)

    print("KERNEL_OK")
</pallas_src>

<mosaic_0001>
module attributes {stable_mosaic.version = 11 : i64} {
  func.func @_center_loss_kernel(%arg0: i32, %arg1: memref<8xi32, #tpu.memory_space<smem>>, %arg2: memref<8x128xf32, #tpu.memory_space<vmem>>, %arg3: memref<16x128xf32, #tpu.memory_space<vmem>>, %arg4: memref<8x128xf32, #tpu.memory_space<vmem>>, %arg5: memref<8x128xf32, #tpu.memory_space<vmem>>) attributes {dimension_semantics = [#tpu.dimension_semantics<parallel>], iteration_bounds = array<i64: 1>, scalar_prefetch = 1 : i64, scratch_operands = 1 : i64, tpu.core_type = #tpu.core_type<tc>, window_params = [{transform_indices = @transform_0, window_bounds = array<i64: 8, 128>}, {pipeline_mode = #tpu.pipeline_mode<synchronous>, transform_indices = @transform_1, window_bounds = array<i64: 16, 128>}, {transform_indices = @transform_2, window_bounds = array<i64: 8, 128>}]} {
    %c8_i32 = arith.constant 8 : i32
    %0 = arith.muli %arg0, %c8_i32 : i32
    %c0_i32 = arith.constant 0 : i32
    %1 = arith.addi %0, %c0_i32 : i32
    %2 = arith.index_cast %1 : i32 to index
    %3 = memref.load %arg1[%2] : memref<8xi32, #tpu.memory_space<smem>>
    %c0_i32_0 = arith.constant 0 : i32
    %4 = arith.maxsi %3, %c0_i32_0 : i32
    %c15_i32 = arith.constant 15 : i32
    %5 = arith.minsi %4, %c15_i32 : i32
    %6 = arith.index_cast %5 : i32 to index
    %c0 = arith.constant 0 : index
    %7 = vector.load %arg3[%6, %c0] : memref<16x128xf32, #tpu.memory_space<vmem>>, vector<1x128xf32>
    %8 = vector.shape_cast %7 : vector<1x128xf32> to vector<128xf32>
    %9 = arith.index_cast %c0_i32 : i32 to index
    %c0_1 = arith.constant 0 : index
    %10 = vector.load %arg5[%9, %c0_1] : memref<8x128xf32, #tpu.memory_space<vmem>>, vector<1x128xf32>
    %11 = vector.shape_cast %10 : vector<1x128xf32> to vector<128xf32>
    %12 = vector.shape_cast %8 : vector<128xf32> to vector<1x128xf32>
    tpu.vector_store %arg5[%9, %c0_1], %12 {strides = array<i32>} : memref<8x128xf32, #tpu.memory_space<vmem>>, vector<1x128xf32>,
    %c1_i32 = arith.constant 1 : i32
    %13 = arith.addi %0, %c1_i32 : i32
    %14 = arith.index_cast %13 : i32 to index
    %15 = memref.load %arg1[%14] : memref<8xi32, #tpu.memory_space<smem>>
    %c0_i32_2 = arith.constant 0 : i32
    %16 = arith.maxsi %15, %c0_i32_2 : i32
    %c15_i32_3 = arith.constant 15 : i32
    %17 = arith.minsi %16, %c15_i32_3 : i32
    %18 = arith.index_cast %17 : i32 to index
    %c0_4 = arith.constant 0 : index
    %19 = vector.load %arg3[%18, %c0_4] : memref<16x128xf32, #tpu.memory_space<vmem>>, vector<1x128xf32>
    %20 = vector.shape_cast %19 : vector<1x128xf32> to vector<128xf32>
    %21 = arith.index_cast %c1_i32 : i32 to index
    %c0_5 = arith.constant 0 : index
    %22 = vector.load %arg5[%21, %c0_5] : memref<8x128xf32, #tpu.memory_space<vmem>>, vector<1x128xf32>
    %23 = vector.shape_cast %22 : vector<1x128xf32> to vector<128xf32>
    %24 = vector.shape_cast %20 : vector<128xf32> to vector<1x128xf32>
    tpu.vector_store %arg5[%21, %c0_5], %24 {strides = array<i32>} : memref<8x128xf32, #tpu.memory_space<vmem>>, vector<1x128xf32>,
    %c2_i32 = arith.constant 2 : i32
    %25 = arith.addi %0, %c2_i32 : i32
    %26 = arith.index_cast %25 : i32 to index
    %27 = memref.load %arg1[%26] : memref<8xi32, #tpu.memory_space<smem>>
    %c0_i32_6 = arith.constant 0 : i32
    %28 = arith.maxsi %27, %c0_i32_6 : i32
    %c15_i32_7 = arith.constant 15 : i32
    %29 = arith.minsi %28, %c15_i32_7 : i32
    %30 = arith.index_cast %29 : i32 to index
    %c0_8 = arith.constant 0 : index
    %31 = vector.load %arg3[%30, %c0_8] : memref<16x128xf32, #tpu.memory_space<vmem>>, vector<1x128xf32>
    %32 = vector.shape_cast %31 : vector<1x128xf32> to vector<128xf32>
    %33 = arith.index_cast %c2_i32 : i32 to index
    %c0_9 = arith.constant 0 : index
    %34 = vector.load %arg5[%33, %c0_9] : memref<8x128xf32, #tpu.memory_space<vmem>>, vector<1x128xf32>
    %35 = vector.shape_cast %34 : vector<1x128xf32> to vector<128xf32>
    %36 = vector.shape_cast %32 : vector<128xf32> to vector<1x128xf32>
    tpu.vector_store %arg5[%33, %c0_9], %36 {strides = array<i32>} : memref<8x128xf32, #tpu.memory_space<vmem>>, vector<1x128xf32>,
    %c3_i32 = arith.constant 3 : i32
    %37 = arith.addi %0, %c3_i32 : i32
    %38 = arith.index_cast %37 : i32 to index
    %39 = memref.load %arg1[%38] : memref<8xi32, #tpu.memory_space<smem>>
    %c0_i32_10 = arith.constant 0 : i32
    %40 = arith.maxsi %39, %c0_i32_10 : i32
    %c15_i32_11 = arith.constant 15 : i32
    %41 = arith.minsi %40, %c15_i32_11 : i32
    %42 = arith.index_cast %41 : i32 to index
    %c0_12 = arith.constant 0 : index
    %43 = vector.load %arg3[%42, %c0_12] : memref<16x128xf32, #tpu.memory_space<vmem>>, vector<1x128xf32>
    %44 = vector.shape_cast %43 : vector<1x128xf32> to vector<128xf32>
    %45 = arith.index_cast %c3_i32 : i32 to index
    %c0_13 = arith.constant 0 : index
    %46 = vector.load %arg5[%45, %c0_13] : memref<8x128xf32, #tpu.memory_space<vmem>>, vector<1x128xf32>
    %47 = vector.shape_cast %46 : vector<1x128xf32> to vector<128xf32>
    %48 = vector.shape_cast %44 : vector<128xf32> to vector<1x128xf32>
    tpu.vector_store %arg5[%45, %c0_13], %48 {strides = array<i32>} : memref<8x128xf32, #tpu.memory_space<vmem>>, vector<1x128xf32>,
    %c4_i32 = arith.constant 4 : i32
    %49 = arith.addi %0, %c4_i32 : i32
    %50 = arith.index_cast %49 : i32 to index
    %51 = memref.load %arg1[%50] : memref<8xi32, #tpu.memory_space<smem>>
    %c0_i32_14 = arith.constant 0 : i32
    %52 = arith.maxsi %51, %c0_i32_14 : i32
    %c15_i32_15 = arith.constant 15 : i32
    %53 = arith.minsi %52, %c15_i32_15 : i32
    %54 = arith.index_cast %53 : i32 to index
    %c0_16 = arith.constant 0 : index
    %55 = vector.load %arg3[%54, %c0_16] : memref<16x128xf32, #tpu.memory_space<vmem>>, vector<1x128xf32>
    %56 = vector.shape_cast %55 : vector<1x128xf32> to vector<128xf32>
    %57 = arith.index_cast %c4_i32 : i32 to index
    %c0_17 = arith.constant 0 : index
    %58 = vector.load %arg5[%57, %c0_17] : memref<8x128xf32, #tpu.memory_space<vmem>>, vector<1x128xf32>
    %59 = vector.shape_cast %58 : vector<1x128xf32> to vector<128xf32>
    %60 = vector.shape_cast %56 : vector<128xf32> to vector<1x128xf32>
    tpu.vector_store %arg5[%57, %c0_17], %60 {strides = array<i32>} : memref<8x128xf32, #tpu.memory_space<vmem>>, vector<1x128xf32>,
    %c5_i32 = arith.constant 5 : i32
    %61 = arith.addi %0, %c5_i32 : i32
    %62 = arith.index_cast %61 : i32 to index
    %63 = memref.load %arg1[%62] : memref<8xi32, #tpu.memory_space<smem>>
    %c0_i32_18 = arith.constant 0 : i32
    %64 = arith.maxsi %63, %c0_i32_18 : i32
    %c15_i32_19 = arith.constant 15 : i32
    %65 = arith.minsi %64, %c15_i32_19 : i32
    %66 = arith.index_cast %65 : i32 to index
    %c0_20 = arith.constant 0 : index
    %67 = vector.load %arg3[%66, %c0_20] : memref<16x128xf32, #tpu.memory_space<vmem>>, vector<1x128xf32>
    %68 = vector.shape_cast %67 : vector<1x128xf32> to vector<128xf32>
    %69 = arith.index_cast %c5_i32 : i32 to index
    %c0_21 = arith.constant 0 : index
    %70 = vector.load %arg5[%69, %c0_21] : memref<8x128xf32, #tpu.memory_space<vmem>>, vector<1x128xf32>
    %71 = vector.shape_cast %70 : vector<1x128xf32> to vector<128xf32>
    %72 = vector.shape_cast %68 : vector<128xf32> to vector<1x128xf32>
    tpu.vector_store %arg5[%69, %c0_21], %72 {strides = array<i32>} : memref<8x128xf32, #tpu.memory_space<vmem>>, vector<1x128xf32>,
    %c6_i32 = arith.constant 6 : i32
    %73 = arith.addi %0, %c6_i32 : i32
    %74 = arith.index_cast %73 : i32 to index
    %75 = memref.load %arg1[%74] : memref<8xi32, #tpu.memory_space<smem>>
    %c0_i32_22 = arith.constant 0 : i32
    %76 = arith.maxsi %75, %c0_i32_22 : i32
    %c15_i32_23 = arith.constant 15 : i32
    %77 = arith.minsi %76, %c15_i32_23 : i32
    %78 = arith.index_cast %77 : i32 to index
    %c0_24 = arith.constant 0 : index
    %79 = vector.load %arg3[%78, %c0_24] : memref<16x128xf32, #tpu.memory_space<vmem>>, vector<1x128xf32>
    %80 = vector.shape_cast %79 : vector<1x128xf32> to vector<128xf32>
    %81 = arith.index_cast %c6_i32 : i32 to index
    %c0_25 = arith.constant 0 : index
    %82 = vector.load %arg5[%81, %c0_25] : memref<8x128xf32, #tpu.memory_space<vmem>>, vector<1x128xf32>
    %83 = vector.shape_cast %82 : vector<1x128xf32> to vector<128xf32>
    %84 = vector.shape_cast %80 : vector<128xf32> to vector<1x128xf32>
    tpu.vector_store %arg5[%81, %c0_25], %84 {strides = array<i32>} : memref<8x128xf32, #tpu.memory_space<vmem>>, vector<1x128xf32>,
    %c7_i32 = arith.constant 7 : i32
    %85 = arith.addi %0, %c7_i32 : i32
    %86 = arith.index_cast %85 : i32 to index
    %87 = memref.load %arg1[%86] : memref<8xi32, #tpu.memory_space<smem>>
    %c0_i32_26 = arith.constant 0 : i32
    %88 = arith.maxsi %87, %c0_i32_26 : i32
    %c15_i32_27 = arith.constant 15 : i32
    %89 = arith.minsi %88, %c15_i32_27 : i32
    %90 = arith.index_cast %89 : i32 to index
    %c0_28 = arith.constant 0 : index
    %91 = vector.load %arg3[%90, %c0_28] : memref<16x128xf32, #tpu.memory_space<vmem>>, vector<1x128xf32>
    %92 = vector.shape_cast %91 : vector<1x128xf32> to vector<128xf32>
    %93 = arith.index_cast %c7_i32 : i32 to index
    %c0_29 = arith.constant 0 : index
    %94 = vector.load %arg5[%93, %c0_29] : memref<8x128xf32, #tpu.memory_space<vmem>>, vector<1x128xf32>
    %95 = vector.shape_cast %94 : vector<1x128xf32> to vector<128xf32>
    %96 = vector.shape_cast %92 : vector<128xf32> to vector<1x128xf32>
    tpu.vector_store %arg5[%93, %c0_29], %96 {strides = array<i32>} : memref<8x128xf32, #tpu.memory_space<vmem>>, vector<1x128xf32>,
    %c8_i32_30 = arith.constant 8 : i32
    %c0_31 = arith.constant 0 : index
    %c0_32 = arith.constant 0 : index
    %97 = vector.load %arg2[%c0_31, %c0_32] : memref<8x128xf32, #tpu.memory_space<vmem>>, vector<8x128xf32>
    %c0_33 = arith.constant 0 : index
    %c0_34 = arith.constant 0 : index
    %98 = vector.load %arg5[%c0_33, %c0_34] : memref<8x128xf32, #tpu.memory_space<vmem>>, vector<8x128xf32>
    %99 = tpu.iota {dimensions = array<i32: 0>} : vector<8x1xi32>
    %100 = vector.broadcast %0 : i32 to vector<8x1xi32>
    %101 = arith.addi %99, %100 : vector<8x1xi32>
    %c8_i32_35 = arith.constant 8 : i32
    %102 = vector.broadcast %c8_i32_35 : i32 to vector<8x1xi32>
    %103 = arith.cmpi slt, %101, %102 : vector<8x1xi32>
    %104 = arith.extui %103 : vector<8x1xi1> to vector<8x1xi32>
    %105 = arith.sitofp %104 : vector<8x1xi32> to vector<8x1xf32>
    %106 = arith.subf %97, %98 : vector<8x128xf32>
    %107 = vector.broadcast %105 : vector<8x1xf32> to vector<8x128xf32>
    %108 = arith.mulf %106, %107 : vector<8x128xf32>
    %109 = arith.mulf %108, %108 : vector<8x128xf32>
    %110 = vector.shape_cast %109 : vector<8x128xf32> to vector<1x8x128xf32>
    %cst = arith.constant dense<0.000000e+00> : vector<8x128xf32>
    %111 = vector.multi_reduction <add>, %110, %cst [0] : vector<1x8x128xf32> to vector<8x128xf32>
    %c0_36 = arith.constant 0 : index
    %c0_37 = arith.constant 0 : index
    %112 = vector.load %arg4[%c0_36, %c0_37] : memref<8x128xf32, #tpu.memory_space<vmem>>, vector<8x128xf32>
    tpu.vector_store %arg4[%c0_36, %c0_37], %111 {strides = array<i32>} : memref<8x128xf32, #tpu.memory_space<vmem>>, vector<8x128xf32>,
    return
  }
  func.func @transform_0(%arg0: i32, %arg1: memref<8xi32, #tpu.memory_space<smem>>) -> (i32, i32) {
    %c0_i32 = arith.constant 0 : i32
    %c0_i32_0 = arith.constant 0 : i32
    return %arg0, %c0_i32 : i32, i32
  }
  func.func @transform_1(%arg0: i32, %arg1: memref<8xi32, #tpu.memory_space<smem>>) -> (i32, i32) {
    %c0_i32 = arith.constant 0 : i32
    %c0_i32_0 = arith.constant 0 : i32
    %c0_i32_1 = arith.constant 0 : i32
    return %c0_i32, %c0_i32_0 : i32, i32
  }
  func.func @transform_2(%arg0: i32, %arg1: memref<8xi32, #tpu.memory_space<smem>>) -> (i32, i32) {
    %c0_i32 = arith.constant 0 : i32
    %c0_i32_0 = arith.constant 0 : i32
    return %arg0, %c0_i32 : i32, i32
  }
}

</mosaic_0001>

<llo_original>
// kernel: tpu_custom_call.1
$region0: #{tpu_custom_call.1}
  #allocation0 [shape = 'u32[]', space=smem, size = 0x4, offset = 0x4, fixed_abs, tag = 'smem constant byte address 0x4 - core index']
  #allocation1 [shape = 'u32[144,128]{1,0:T(1,128)}', space=vmem, size = 0x12000, scoped, tag = 'internal scratch']
  #allocation2 [shape = 'f32[8,128]{1,0:T(8,128)}', space=vmem, size = 0x1000, scoped, tag = 'scratch operand']
  #allocation3 [shape = 's32[1]{0}', space=sflag, size = 0x4, scoped, tag = 'scoped memory for tpu_custom_call.1']
  #allocation4 [shape = 'u8[512]{0}', space=smem, size = 0x200, scoped, tag = 'prefetched SMEM operand 0']
  %s0 = inlined_call_operand.hbm [shape: s32[8], index: 0, kind: input, shape index: {}]
  %s1 = inlined_call_operand.hbm [shape: f32[8,128], index: 1, kind: input, shape index: {}]
  %s2 = inlined_call_operand.hbm [shape: f32[16,128], index: 2, kind: input, shape index: {}]
  %s3 = inlined_call_operand.hbm [shape: f32[8,128], index: 3, kind: output, shape index: {}]
  %s4 = sld [smem:[#allocation0]]
  $region26: #{tpu_custom_call.1} parent=0
    _
  %s6 = ssub.s32 1, %s4
  %s7 = scalar_select 0, %s6, %s4
  %9 = dma.hbm_to_smem %s0, 16, [#allocation4], [#allocation3]
  %10 = dma.done [#allocation3], 16
  %11 = sfence
  $region1: #{tpu_custom_call.1} parent=0
    #allocation5 [shape = 'u8[4096]{0}', space=vmem, size = 0x1000, scoped, tag = 'input window, operand 1, single buffered']
    #allocation6 [shape = 's32[1]{0}', space=sflag, size = 0x4, scoped, tag = 'scoped memory for tpu_custom_call.1']
    #allocation7 [shape = 's32[1]{0}', space=sflag, size = 0x4, scoped, tag = 'scoped memory for tpu_custom_call.1']
    #allocation8 [shape = 'u8[8192]{0}', space=vmem, size = 0x2000, scoped, tag = 'input window, operand 2, single buffered']
    #allocation9 [shape = 's32[1]{0}', space=sflag, size = 0x4, scoped, tag = 'scoped memory for tpu_custom_call.1']
    #allocation10 [shape = 'u8[4096]{0}', space=vmem, size = 0x1000, scoped, tag = 'output window, operand 0, single buffered']
    %12 = vsyncpa [#allocation6], 0
    %13 = vsyncpa [#allocation9], 0
    %14 = vsyncpa [#allocation7], 0
    // Predicated region
    $region2: #{tpu_custom_call.1} parent=1 // pred_check
      _
    $region3: #{tpu_custom_call.1} parent=1 // pred_check_branch
      %16 = sbr.rel (0) target = $region5
    $region4: #{tpu_custom_call.1} parent=1 // pred_region
      %s18 = ssub.s32 128, 128
      %19 = vsyncadd [#allocation6], %s18
      %s21 = sshll.u32 [#allocation5], 4
      %s22 = int_to_ptr.vmem [resolvable:$true] %s21
      %24 = dma.hbm_to_vmem [thread:$0]  %s1, 128, %s22, [#allocation6]
    $region5: #{tpu_custom_call.1} parent=1 // pred_fallthru
      _
    // Predicated region
    $region6: #{tpu_custom_call.1} parent=1 // pred_check
      _
    $region7: #{tpu_custom_call.1} parent=1 // pred_check_branch
      %26 = sbr.rel (0) target = $region9
    $region8: #{tpu_custom_call.1} parent=1 // pred_region
      %s28 = ssub.s32 256, 256
      %29 = vsyncadd [#allocation9], %s28
      %s30 = sshll.u32 [#allocation8], 4
      %s31 = int_to_ptr.vmem [resolvable:$true] %s30
      %36 = dma.hbm_to_vmem [thread:$0]  %s2, 256, %s31, [#allocation9], 128, 128, 8
    $region9: #{tpu_custom_call.1} parent=1 // pred_fallthru
      _
    // Predicated region
    $region10: #{tpu_custom_call.1} parent=1 // pred_check
      _
    $region11: #{tpu_custom_call.1} parent=1 // pred_check_branch
      %38 = sbr.rel (0) target = $region13
    $region12: #{tpu_custom_call.1} parent=1 // pred_region
      %39 = dma.done [#allocation6], 128
    $region13: #{tpu_custom_call.1} parent=1 // pred_fallthru
      _
    // Predicated region
    $region14: #{tpu_custom_call.1} parent=1 // pred_check
      _
    $region15: #{tpu_custom_call.1} parent=1 // pred_check_branch
      %41 = sbr.rel (0) target = $region17
    $region16: #{tpu_custom_call.1} parent=1 // pred_region
      %42 = dma.done [#allocation9], 256
    $region17: #{tpu_custom_call.1} parent=1 // pred_fallthru
      _
    %s43 = smul.u32 0, 8
    %s44 = sld [smem:[#allocation4 + %s43]]
    %p45 = scmp.gt.s32.totalorder %s44, 0
    %s46 = scalar_select %p45, %s44, 0
    %p47 = scmp.lt.s32.totalorder %s46, 15
    %s48 = scalar_select %p47, %s46, 15
    %s49 = scalar_lea.vmem [#allocation8], %s48
    %v50 = vld [vmem:[%s49] sm:$0x1]
    %51 = vst [vmem:[#allocation2] sm:$0x1] %v50
    %s52 = sadd.s32 %s43, 1
    %s53 = sld [smem:[#allocation4 + %s52]]
    %p54 = scmp.gt.s32.totalorder %s53, 0
    %s55 = scalar_select %p54, %s53, 0
    %p56 = scmp.lt.s32.totalorder %s55, 15
    %s57 = scalar_select %p56, %s55, 15
    %s58 = scalar_lea.vmem [#allocation8], %s57
    %v59 = vld [vmem:[%s58] sm:$0x1]
    %60 = vst [vmem:[#allocation2 + $0x1] sm:$0x1] %v59
    %s61 = sadd.s32 %s43, 2
    %s62 = sld [smem:[#allocation4 + %s61]]
    %p63 = scmp.gt.s32.totalorder %s62, 0
    %s64 = scalar_select %p63, %s62, 0
    %p65 = scmp.lt.s32.totalorder %s64, 15
    %s66 = scalar_select %p65, %s64, 15
    %s67 = scalar_lea.vmem [#allocation8], %s66
    %v68 = vld [vmem:[%s67] sm:$0x1]
    %69 = vst [vmem:[#allocation2 + $0x2] sm:$0x1] %v68
    %s70 = sadd.s32 %s43, 3
    %s71 = sld [smem:[#allocation4 + %s70]]
    %p72 = scmp.gt.s32.totalorder %s71, 0
    %s73 = scalar_select %p72, %s71, 0
    %p74 = scmp.lt.s32.totalorder %s73, 15
    %s75 = scalar_select %p74, %s73, 15
    %s76 = scalar_lea.vmem [#allocation8], %s75
    %v77 = vld [vmem:[%s76] sm:$0x1]
    %78 = vst [vmem:[#allocation2 + $0x3] sm:$0x1] %v77
    %s79 = sadd.s32 %s43, 4
    %s80 = sld [smem:[#allocation4 + %s79]]
    %p81 = scmp.gt.s32.totalorder %s80, 0
    %s82 = scalar_select %p81, %s80, 0
    %p83 = scmp.lt.s32.totalorder %s82, 15
    %s84 = scalar_select %p83, %s82, 15
    %s85 = scalar_lea.vmem [#allocation8], %s84
    %v86 = vld [vmem:[%s85] sm:$0x1]
    %87 = vst [vmem:[#allocation2 + $0x4] sm:$0x1] %v86
    %s88 = sadd.s32 %s43, 5
    %s89 = sld [smem:[#allocation4 + %s88]]
    %p90 = scmp.gt.s32.totalorder %s89, 0
    %s91 = scalar_select %p90, %s89, 0
    %p92 = scmp.lt.s32.totalorder %s91, 15
    %s93 = scalar_select %p92, %s91, 15
    %s94 = scalar_lea.vmem [#allocation8], %s93
    %v95 = vld [vmem:[%s94] sm:$0x1]
    %96 = vst [vmem:[#allocation2 + $0x5] sm:$0x1] %v95
    %s97 = sadd.s32 %s43, 6
    %s98 = sld [smem:[#allocation4 + %s97]]
    %p99 = scmp.gt.s32.totalorder %s98, 0
    %s100 = scalar_select %p99, %s98, 0
    %p101 = scmp.lt.s32.totalorder %s100, 15
    %s102 = scalar_select %p101, %s100, 15
    %s103 = scalar_lea.vmem [#allocation8], %s102
    %v104 = vld [vmem:[%s103] sm:$0x1]
    %105 = vst [vmem:[#allocation2 + $0x6] sm:$0x1] %v104
    %s106 = sadd.s32 %s43, 7
    %s107 = sld [smem:[#allocation4 + %s106]]
    %p108 = scmp.gt.s32.totalorder %s107, 0
    %s109 = scalar_select %p108, %s107, 0
    %p110 = scmp.lt.s32.totalorder %s109, 15
    %s111 = scalar_select %p110, %s109, 15
    %s112 = scalar_lea.vmem [#allocation8], %s111
    %v113 = vld [vmem:[%s112] sm:$0x1]
    %114 = vst [vmem:[#allocation2 + $0x7] sm:$0x1] %v113
    %v115 = vld [vmem:[#allocation5] sm:$0xff]
    %v116 = vld [vmem:[#allocation2] sm:$0xff]
    %v117 = vlaneseq
    %v118 = vshrl.u32 %v117, 7
    %v119 = vstv %s43
    %v120 = vadd.s32 %v118, %v119
    %vm121 = vcmp.lt.s32.totalorder %v120, 8
    %v122 = vsel %vm121, 1, 0
    %v123 = vcvt.s32.f32 %v122
    %v124 = vsub.f32 %v115, %v116
    %v125 = vmul.f32 %v124, %v123
    %v126 = vmul.f32 %v125, %v125
    %v127 = vadd.f32 %v126, 0.0
    %128 = vst [vmem:[#allocation10] sm:$0xff] %v127
    // Predicated region
    $region18: #{tpu_custom_call.1} parent=1 // pred_check
      _
    $region19: #{tpu_custom_call.1} parent=1 // pred_check_branch
      %130 = sbr.rel (0) target = $region21
    $region20: #{tpu_custom_call.1} parent=1 // pred_region
      %s132 = ssub.s32 128, 128
      %133 = vsyncadd [#allocation7], %s132
      %s135 = sshll.u32 [#allocation10], 4
      %s136 = int_to_ptr.vmem [resolvable:$true] %s135
      %138 = dma.vmem_to_hbm [thread:$0]  %s136, 128, %s3, [#allocation7]
    $region21: #{tpu_custom_call.1} parent=1 // pred_fallthru
      _
    // Predicated region
    $region22: #{tpu_custom_call.1} parent=1 // pred_check
      _
    $region23: #{tpu_custom_call.1} parent=1 // pred_check_branch
      %140 = sbr.rel (0) target = $region25
    $region24: #{tpu_custom_call.1} parent=1 // pred_region
      %141 = dma.done [#allocation7], 128
    $region25: #{tpu_custom_call.1} parent=1 // pred_fallthru
      _
    %142 = vsyncpa [#allocation6], 1
    %143 = vsyncpa [#allocation9], 1
    %144 = vsyncpa [#allocation7], 1

</llo_original>
